<compile_context>
chip_gen: v7x
topology: tpu7x:2x2x1
jax: 0.10.0
libtpu: 0.0.40
codegen_flags: <defaults>
</compile_context>

<pallas_src>
import jax
import jax.numpy as jnp
from jax.experimental import pallas as pl
from jax.experimental.pallas import tpu as pltpu


_LANE = 128
_SUBLANE = 8
_BLOCK_BUDGET_BYTES = 2 * 1024 * 1024   # per-block VMEM target (x~4 with dbl-buffered in+out)
_PALLAS_MIN_BYTES = 1 << 20             # below this, a fused XLA slice wins


def _same_pad_kernel(x_ref, o_ref):
    # Plain block copy.  When the block spans the full (untiled) time axis, the
    # input block is `remove` steps wider and the static slice trims the tail;
    # when time is tiled, both blocks have equal width and this is a full copy.
    o_ref[...] = x_ref[:, : o_ref.shape[-1]]


def _choose_tiles(rows, t_in, t_out, itemsize, budget):
    """Pick (row_tile, in_time_block, out_time_block) within the VMEM budget."""
    r_min = min(rows, _SUBLANE)
    if r_min * t_in * itemsize <= budget:
        # Full-width time blocks (no redundant reads); tile rows up to budget.
        budget_rows = budget // (t_in * itemsize)
        if budget_rows >= rows:
            r_tile = rows                                    # full extent
        else:
            r_tile = max(_SUBLANE, (budget_rows // _SUBLANE) * _SUBLANE)
        return r_tile, t_in, t_out
    # Time axis is very long: tile it in lane-dense 128-multiple chunks.
    r_tile = r_min
    t_tile = max(_LANE, (budget // (r_tile * itemsize)) // _LANE * _LANE)
    t_tile = min(t_tile, pl.cdiv(t_out, _LANE) * _LANE)
    return r_tile, t_tile, t_tile


def same_pad(x: jnp.ndarray, kernel_size: int, causal: bool = False, *,
             min_pallas_bytes: int = _PALLAS_MIN_BYTES,
             block_budget_bytes: int = _BLOCK_BUDGET_BYTES) -> jnp.ndarray:
    """Pallas implementation of SamePad.forward for x of shape (N, C, T)."""
    if causal:
        remove = kernel_size - 1
    else:
        remove = 1 if kernel_size % 2 == 0 else 0

    if remove <= 0:
        return x                                   # identity

    n, c, t = x.shape
    t_out = t - remove
    if t_out <= 0:
        # Match PyTorch: x[:, :, :-remove] is empty when remove >= T.
        return x[:, :, :max(t_out, 0)]

    itemsize = jnp.dtype(x.dtype).itemsize
    if x.size * itemsize < min_pallas_bytes:
        # Zero-FLOP trim on a tiny array: plain slice fuses into the consumer.
        return x[:, :, :t_out]

    # Flatten (N, C) -> rows: sublane-dense blocks, free for contiguous NCT.
    rows = n * c
    x2 = x.reshape(rows, t)

    r_tile, in_bt, out_bt = _choose_tiles(rows, t, t_out, itemsize,
                                          block_budget_bytes)
    grid = (pl.cdiv(rows, r_tile), pl.cdiv(t_out, out_bt))

    y2 = pl.pallas_call(
        _same_pad_kernel,
        out_shape=jax.ShapeDtypeStruct((rows, t_out), x.dtype),
        grid=grid,
        in_specs=[pl.BlockSpec((r_tile, in_bt), lambda i, j: (i, j))],
        out_specs=pl.BlockSpec((r_tile, out_bt), lambda i, j: (i, j)),
        compiler_params=pltpu.CompilerParams(
            dimension_semantics=("parallel", "parallel")),
    )(x2)
    return y2.reshape(n, c, t_out)


if __name__ == "__main__":
    key = jax.random.PRNGKey(0)

    # 1) Small canonical shape (N, C, T); force the Pallas path so the kernel
    #    itself is exercised (the production default would take the XLA slice).
    N, C, T = 2, 4, 16
    x = jax.random.normal(key, (N, C, T), dtype=jnp.float32)

    y = same_pad(x, kernel_size=2, causal=False, min_pallas_bytes=0)  # remove=1
    jax.block_until_ready(y)
    assert y.shape == (N, C, T - 1), y.shape
    assert jnp.array_equal(y, x[:, :, :-1]), "mismatch vs reference slice"

    # 2) Causal path: kernel_size=3 -> remove=2.
    y_causal = same_pad(x, kernel_size=3, causal=True, min_pallas_bytes=0)
    jax.block_until_ready(y_causal)
    assert jnp.array_equal(y_causal, x[:, :, :-2])

    # 3) Identity path: odd kernel, non-causal -> remove=0.
    y_id = same_pad(x, kernel_size=3, causal=False)
    jax.block_until_ready(y_id)
    assert jnp.array_equal(y_id, x)

    # 4) Exercise row tiling with a ragged last row block (rows=35 not % 8):
    #    tiny block budget forces a multi-tile grid at small shapes.
    k2 = jax.random.PRNGKey(1)
    x_rows = jax.random.normal(k2, (5, 7, 64), dtype=jnp.float32)
    y_rows = same_pad(x_rows, kernel_size=2, causal=False,
                      min_pallas_bytes=0, block_budget_bytes=2048)
    jax.block_until_ready(y_rows)
    assert jnp.array_equal(y_rows, x_rows[:, :, :-1])

    # 5) Exercise lane-dense time tiling (128-multiple blocks, masked tail) and
    #    ragged row tiles, in bf16.
    k3 = jax.random.PRNGKey(2)
    x_tt = jax.random.normal(k3, (3, 17, 260), dtype=jnp.bfloat16)
    y_tt = same_pad(x_tt, kernel_size=4, causal=False,   # remove=1 -> t_out=259
                    min_pallas_bytes=0, block_budget_bytes=4096)
    jax.block_until_ready(y_tt)
    assert y_tt.shape == (3, 17, 259), y_tt.shape
    assert jnp.array_equal(y_tt, x_tt[:, :, :-1])

    print("KERNEL_OK")
</pallas_src>

<mosaic_0001>
module attributes {stable_mosaic.version = 11 : i64} {
  func.func @_same_pad_kernel(%arg0: i32, %arg1: i32, %arg2: memref<8x16xf32, #tpu.memory_space<vmem>>, %arg3: memref<8x15xf32, #tpu.memory_space<vmem>>) attributes {dimension_semantics = [#tpu.dimension_semantics<parallel>, #tpu.dimension_semantics<parallel>], iteration_bounds = array<i64: 1, 1>, scalar_prefetch = 0 : i64, scratch_operands = 0 : i64, tpu.core_type = #tpu.core_type<tc>, window_params = [{transform_indices = @transform_0, window_bounds = array<i64: 8, 16>}, {transform_indices = @transform_1, window_bounds = array<i64: 8, 15>}]} {
    %c0 = arith.constant 0 : index
    %c0_0 = arith.constant 0 : index
    %0 = vector.load %arg2[%c0, %c0_0] : memref<8x16xf32, #tpu.memory_space<vmem>>, vector<8x15xf32>
    %c0_1 = arith.constant 0 : index
    %c0_2 = arith.constant 0 : index
    %1 = vector.load %arg3[%c0_1, %c0_2] : memref<8x15xf32, #tpu.memory_space<vmem>>, vector<8x15xf32>
    tpu.vector_store %arg3[%c0_1, %c0_2], %0 {strides = array<i32>} : memref<8x15xf32, #tpu.memory_space<vmem>>, vector<8x15xf32>,
    return
  }
  func.func @transform_0(%arg0: i32, %arg1: i32) -> (i32, i32) {
    %c0_i32 = arith.constant 0 : i32
    return %arg0, %arg1 : i32, i32
  }
  func.func @transform_1(%arg0: i32, %arg1: i32) -> (i32, i32) {
    %c0_i32 = arith.constant 0 : i32
    return %arg0, %arg1 : i32, i32
  }
}

</mosaic_0001>

<llo_original>
// kernel: tpu_custom_call.1
$region0: #{tpu_custom_call.1}
  #allocation0 [shape = 'u32[]', space=smem, size = 0x4, offset = 0x4, fixed_abs, tag = 'smem constant byte address 0x4 - core index']
  #allocation1 [shape = 'u32[144,128]{1,0:T(1,128)}', space=vmem, size = 0x12000, scoped, tag = 'internal scratch']
  %s0 = inlined_call_operand.hbm [shape: f32[8,16], index: 0, kind: input, shape index: {}]
  %s1 = inlined_call_operand.hbm [shape: f32[8,15], index: 1, kind: output, shape index: {}]
  %s2 = sld [smem:[#allocation0]]
  $region18: #{tpu_custom_call.1} parent=0
    _
  %s4 = ssub.s32 1, %s2
  %s5 = scalar_select 0, %s4, %s2
  $region1: #{tpu_custom_call.1} parent=0
    #allocation2 [shape = 'u8[4096]{0}', space=vmem, size = 0x1000, scoped, tag = 'input window, operand 0, single buffered']
    #allocation3 [shape = 's32[1]{0}', space=sflag, size = 0x4, scoped, tag = 'scoped memory for tpu_custom_call.1']
    #allocation4 [shape = 's32[1]{0}', space=sflag, size = 0x4, scoped, tag = 'scoped memory for tpu_custom_call.1']
    #allocation5 [shape = 'u8[4096]{0}', space=vmem, size = 0x1000, scoped, tag = 'output window, operand 0, single buffered']
    %6 = vsyncpa [#allocation3], 0
    %7 = vsyncpa [#allocation4], 0
    // Predicated region
    $region2: #{tpu_custom_call.1} parent=1 // pred_check
      _
    $region3: #{tpu_custom_call.1} parent=1 // pred_check_branch
      %9 = sbr.rel (0) target = $region5
    $region4: #{tpu_custom_call.1} parent=1 // pred_region
      %s11 = ssub.s32 128, 128
      %12 = vsyncadd [#allocation3], %s11
      %s14 = sshll.u32 [#allocation2], 4
      %s15 = int_to_ptr.vmem [resolvable:$true] %s14
      %17 = dma.hbm_to_vmem [thread:$0]  %s0, 128, %s15, [#allocation3]
    $region5: #{tpu_custom_call.1} parent=1 // pred_fallthru
      _
    // Predicated region
    $region6: #{tpu_custom_call.1} parent=1 // pred_check
      _
    $region7: #{tpu_custom_call.1} parent=1 // pred_check_branch
      %19 = sbr.rel (0) target = $region9
    $region8: #{tpu_custom_call.1} parent=1 // pred_region
      %20 = dma.done [#allocation3], 128
    $region9: #{tpu_custom_call.1} parent=1 // pred_fallthru
      _
    %v21 = vld [vmem:[#allocation2] sm:$0xff]
    %vm22 = vcmask 121856
    %23 = vst.msk [vmem:[#allocation5] sm:$0xff] %vm22, %v21
    // Predicated region
    $region10: #{tpu_custom_call.1} parent=1 // pred_check
      _
    $region11: #{tpu_custom_call.1} parent=1 // pred_check_branch
      %25 = sbr.rel (0) target = $region13
    $region12: #{tpu_custom_call.1} parent=1 // pred_region
      %s27 = ssub.s32 128, 128
      %28 = vsyncadd [#allocation4], %s27
      %s30 = sshll.u32 [#allocation5], 4
      %s31 = int_to_ptr.vmem [resolvable:$true] %s30
      %33 = dma.vmem_to_hbm [thread:$0]  %s31, 128, %s1, [#allocation4]
    $region13: #{tpu_custom_call.1} parent=1 // pred_fallthru
      _
    // Predicated region
    $region14: #{tpu_custom_call.1} parent=1 // pred_check
      _
    $region15: #{tpu_custom_call.1} parent=1 // pred_check_branch
      %35 = sbr.rel (0) target = $region17
    $region16: #{tpu_custom_call.1} parent=1 // pred_region
      %36 = dma.done [#allocation4], 128
    $region17: #{tpu_custom_call.1} parent=1 // pred_fallthru
      _
    %37 = vsyncpa [#allocation3], 1
    %38 = vsyncpa [#allocation4], 1

</llo_original>
